<compile_context>
chip_gen: v5e
topology: v5e:2x2
jax: 0.10.0
libtpu: 0.0.40
codegen_flags: <defaults>
</compile_context>

<pallas_src>
import functools

import jax
import jax.numpy as jnp
from jax.experimental import pallas as pl
from jax.experimental.pallas import tpu as pltpu

_LANE = 128
_NEG_MASK = -1e30  # masks padded attention logits out of the softmax (exp underflows to 0)


def _round_up(n, m):
    return (n + m - 1) // m * m


def fuse_params(w_attn, b_attn, w_fc, b_fc, *, weight_dtype=jnp.bfloat16):
    """Fuse the two nn.Linear layers (PyTorch (out, in) convention) into one weight of
    shape (D, 2*D_pad) (K unpadded so x needs no padding; N lane-padded) plus a
    (1, 2*D_pad) f32 bias. Weights stored in bf16 by default (native MXU dtype).
    Call ONCE at init."""
    D = w_attn.shape[0]
    D_pad = _round_up(max(D, _LANE), _LANE)
    wdt = weight_dtype if weight_dtype is not None else w_attn.dtype

    w_cat = jnp.zeros((D, 2 * D_pad), wdt)
    w_cat = w_cat.at[:, :D].set(w_attn.T.astype(wdt))             # attention half
    w_cat = w_cat.at[:, D_pad:D_pad + D].set(w_fc.T.astype(wdt))  # fc half

    b_cat = jnp.zeros((1, 2 * D_pad), jnp.float32)
    b_cat = b_cat.at[0, :D_pad].set(_NEG_MASK)                    # padded attn logits -> masked
    b_cat = b_cat.at[0, :D].set(b_attn.astype(jnp.float32))
    b_cat = b_cat.at[0, D_pad:D_pad + D].set(b_fc.astype(jnp.float32))
    return w_cat, b_cat


def _residual_attention_kernel(x_ref, w_ref, b_ref, o_ref):
    d = o_ref.shape[-1]                 # real feature dim
    d_pad = w_ref.shape[-1] // 2        # lane-padded half width
    x = x_ref[...]                      # (tb, d) in the caller's dtype
    # One fused MXU matmul: [attn_logits | fc] = x @ [Wa^T | Wf^T] + [ba | bf].
    # Operands matched to the weight dtype (bf16) so the MXU runs natively; f32 acc.
    y = jnp.dot(x.astype(w_ref.dtype), w_ref[...],
                preferred_element_type=jnp.float32) + b_ref[...]
    logits = y[:, :d_pad]               # padded cols carry the -1e30 bias -> exp -> 0
    fc = y[:, d_pad:d_pad + d]
    # softmax over the feature (lane) axis == torch.softmax(dim=1) on a 2-D input
    m = jnp.max(logits, axis=-1, keepdims=True)
    e = jnp.exp(logits - m)
    inv = pl.reciprocal(jnp.sum(e, axis=-1, keepdims=True), approx=True)  # EUP vrcp
    attn = e[:, :d] * inv
    o_ref[...] = (attn * x.astype(jnp.float32) + fc).astype(o_ref.dtype)


def _choose_tb(B, D_pad, itemsize):
    """Row tile: sublane-multiple for the activation dtype, bounded so the live f32
    (tb, 2*D_pad) result + exp/attn temporaries stay ~<=4 MiB (no spill pressure on
    wide layers), and small enough on big batches to give >=8 grid steps (megacore +
    pipelining)."""
    sub = {4: 8, 2: 16, 1: 32}.get(int(itemsize), 8)
    cap = (4 << 20) // (2 * D_pad * 4)
    cap = max(sub, min(512, cap // sub * sub))
    if B <= cap:
        return _round_up(B, sub)
    tb = cap
    while tb > 2 * sub and pl.cdiv(B, tb) < 8:
        tb = max(sub, (tb // 2) // sub * sub)
    return tb


def _vmem_limit_bytes(vmem_est):
    """Generation-aware VMEM cap: ~75% of physical VMEM (48 MiB on v7x, 96 MiB on
    v5e/v6e), never below 16 MiB, never more than 2x the actual estimate needs."""
    cap = 128 << 20
    try:
        cap = int(pltpu.get_tpu_info().vmem_capacity_bytes)
    except Exception:
        pass
    return int(min(max(2 * vmem_est, 16 << 20), cap * 3 // 4))


@functools.partial(jax.jit, static_argnames=("tb",))
def residual_attention(x, w_cat, b_cat, *, tb=None):
    """x: (B, D). w_cat/b_cat from fuse_params. Returns (B, D) in x.dtype."""
    B, D = x.shape
    assert w_cat.shape[0] == D, "w_cat rows must match the input feature dim"
    two_dpad = w_cat.shape[1]
    D_pad = two_dpad // 2

    x_bytes = jnp.dtype(x.dtype).itemsize
    w_bytes = jnp.dtype(w_cat.dtype).itemsize
    if tb is None:
        tb = _choose_tb(B, D_pad, x_bytes)

    B_r = _round_up(B, tb)
    if B_r != B:
        # Ragged batch: pad rows only (cheap; zero rows are benign) so every grid
        # step is a full tile; sliced off after the kernel.
        x = jnp.pad(x, ((0, B_r - B), (0, 0)))
    grid = (B_r // tb,)

    vmem_est = (
        2 * tb * D * x_bytes            # double-buffered x tiles
        + 2 * tb * D * x_bytes          # double-buffered out tiles
        + 2 * D * two_dpad * w_bytes    # resident fused weight (constant index_map)
        + 2 * two_dpad * 4              # resident fused bias
        + 2 * tb * two_dpad * 4         # live f32 result + exp/attn temporaries
    )
    vmem_limit = _vmem_limit_bytes(vmem_est)

    flops = 2 * B_r * D * two_dpad + 8 * B_r * D_pad
    bytes_accessed = 2 * B_r * D * x_bytes + D * two_dpad * w_bytes + two_dpad * 4

    out = pl.pallas_call(
        _residual_attention_kernel,
        out_shape=jax.ShapeDtypeStruct((B_r, D), x.dtype),
        grid_spec=pltpu.PrefetchScalarGridSpec(
            num_scalar_prefetch=0,
            grid=grid,
            in_specs=[
                pl.BlockSpec((tb, D), lambda i: (i, 0)),          # x tile, unpadded features
                pl.BlockSpec((D, two_dpad), lambda i: (0, 0)),    # fused weight (resident)
                pl.BlockSpec((1, two_dpad), lambda i: (0, 0)),    # fused bias (resident)
            ],
            out_specs=pl.BlockSpec((tb, D), lambda i: (i, 0)),    # unpadded store, no wrapper slice
        ),
        compiler_params=pltpu.CompilerParams(
            dimension_semantics=("parallel",),   # megacore-shards the batch axis on v7x
            vmem_limit_bytes=vmem_limit,
        ),
        cost_estimate=pl.CostEstimate(
            flops=int(flops),
            transcendentals=int(B_r * D_pad + B_r),
            bytes_accessed=int(bytes_accessed),
        ),
    )(x, w_cat, b_cat)

    return out[:B] if B_r != B else out


def residual_attention_ref(x, w_attn, b_attn, w_fc, b_fc):
    a = x @ w_attn.T + b_attn
    attn = jax.nn.softmax(a, axis=1)
    return attn * x + (x @ w_fc.T + b_fc)


if __name__ == "__main__":
    B, D = 8, 32  # batch, input_dim

    key = jax.random.PRNGKey(0)
    kx, ka, kba, kf, kbf = jax.random.split(key, 5)

    # Deterministic init mirroring nn.Linear default: U(-1/sqrt(in), 1/sqrt(in))
    bound = 1.0 / jnp.sqrt(jnp.float32(D))
    x = jax.random.normal(kx, (B, D), dtype=jnp.float32)
    w_attn = jax.random.uniform(ka, (D, D), jnp.float32, -bound, bound)
    b_attn = jax.random.uniform(kba, (D,), jnp.float32, -bound, bound)
    w_fc = jax.random.uniform(kf, (D, D), jnp.float32, -bound, bound)
    b_fc = jax.random.uniform(kbf, (D,), jnp.float32, -bound, bound)

    # One-time weight fusion/padding (weight-stationary inference); bf16 storage.
    w_cat, b_cat = fuse_params(w_attn, b_attn, w_fc, b_fc)

    out = jax.block_until_ready(residual_attention(x, w_cat, b_cat))
    assert out.shape == (B, D)

    ref = residual_attention_ref(x, w_attn, b_attn, w_fc, b_fc)
    max_err = float(jnp.max(jnp.abs(out - ref)))
    # bf16 weight/operand storage + approx reciprocal => looser tolerance than pure f32
    assert jnp.allclose(out, ref, atol=3e-2, rtol=3e-2), \
        f"mismatch vs reference (max abs err {max_err})"

    print("KERNEL_OK")
</pallas_src>

<mosaic_0001>
module attributes {stable_mosaic.version = 11 : i64} {
  func.func @_residual_attention_kernel(%arg0: i32, %arg1: memref<8x32xf32, #tpu.memory_space<vmem>>, %arg2: memref<32x256xbf16, #tpu.memory_space<vmem>>, %arg3: memref<1x256xf32, #tpu.memory_space<vmem>>, %arg4: memref<8x32xf32, #tpu.memory_space<vmem>>) attributes {dimension_semantics = [#tpu.dimension_semantics<parallel>], iteration_bounds = array<i64: 1>, scalar_prefetch = 0 : i64, scratch_operands = 0 : i64, tpu.core_type = #tpu.core_type<tc>, window_params = [{transform_indices = @transform_0, window_bounds = array<i64: 8, 32>}, {pipeline_mode = #tpu.pipeline_mode<synchronous>, transform_indices = @transform_1, window_bounds = array<i64: 32, 256>}, {pipeline_mode = #tpu.pipeline_mode<synchronous>, transform_indices = @transform_2, window_bounds = array<i64: 1, 256>}, {transform_indices = @transform_3, window_bounds = array<i64: 8, 32>}]} {
    %c0 = arith.constant 0 : index
    %c0_0 = arith.constant 0 : index
    %0 = vector.load %arg1[%c0, %c0_0] : memref<8x32xf32, #tpu.memory_space<vmem>>, vector<8x32xf32>
    %1 = arith.truncf %0 : vector<8x32xf32> to vector<8x32xbf16>
    %c0_1 = arith.constant 0 : index
    %c0_2 = arith.constant 0 : index
    %2 = vector.load %arg2[%c0_1, %c0_2] : memref<32x256xbf16, #tpu.memory_space<vmem>>, vector<32x256xbf16>
    %cst = arith.constant dense<0.000000e+00> : vector<8x256xf32>
    %3 = tpu.matmul %1, %2, %cst {dimension_numbers = #tpu.dot_dimension_numbers<[1], [0], [0], [1], [0, 0, 1, 1], [], []>} : vector<8x32xbf16>, vector<32x256xbf16>, vector<8x256xf32> -> vector<8x256xf32>
    %c0_3 = arith.constant 0 : index
    %c0_4 = arith.constant 0 : index
    %4 = vector.load %arg3[%c0_3, %c0_4] : memref<1x256xf32, #tpu.memory_space<vmem>>, vector<1x256xf32>
    %5 = vector.broadcast %4 : vector<1x256xf32> to vector<8x256xf32>
    %6 = arith.addf %3, %5 : vector<8x256xf32>
    %7 = vector.extract_strided_slice %6 {offsets = [0, 0], sizes = [8, 128], strides = [1, 1]} : vector<8x256xf32> to vector<8x128xf32>
    %8 = vector.extract_strided_slice %6 {offsets = [0, 128], sizes = [8, 32], strides = [1, 1]} : vector<8x256xf32> to vector<8x32xf32>
    %cst_5 = arith.constant dense<0xFF800000> : vector<8xf32>
    %9 = vector.multi_reduction <maximumf>, %7, %cst_5 [1] : vector<8x128xf32> to vector<8xf32>
    %10 = vector.shape_cast %9 : vector<8xf32> to vector<8x1xf32>
    %11 = vector.broadcast %10 : vector<8x1xf32> to vector<8x128xf32>
    %12 = arith.subf %7, %11 : vector<8x128xf32>
    %13 = math.exp %12 : vector<8x128xf32>
    %cst_6 = arith.constant dense<0.000000e+00> : vector<8xf32>
    %14 = vector.multi_reduction <add>, %13, %cst_6 [1] : vector<8x128xf32> to vector<8xf32>
    %15 = vector.shape_cast %14 : vector<8xf32> to vector<8x1xf32>
    %16 = tpu.reciprocal %15 {approx = true} : vector<8x1xf32> -> vector<8x1xf32>
    %17 = vector.extract_strided_slice %13 {offsets = [0, 0], sizes = [8, 32], strides = [1, 1]} : vector<8x128xf32> to vector<8x32xf32>
    %18 = vector.broadcast %16 : vector<8x1xf32> to vector<8x32xf32>
    %19 = arith.mulf %17, %18 : vector<8x32xf32>
    %20 = arith.mulf %19, %0 : vector<8x32xf32>
    %21 = arith.addf %20, %8 : vector<8x32xf32>
    %c0_7 = arith.constant 0 : index
    %c0_8 = arith.constant 0 : index
    %22 = vector.load %arg4[%c0_7, %c0_8] : memref<8x32xf32, #tpu.memory_space<vmem>>, vector<8x32xf32>
    tpu.vector_store %arg4[%c0_7, %c0_8], %21 {strides = array<i32>} : memref<8x32xf32, #tpu.memory_space<vmem>>, vector<8x32xf32>,
    return
  }
  func.func @transform_0(%arg0: i32) -> (i32, i32) {
    %c0_i32 = arith.constant 0 : i32
    %c0_i32_0 = arith.constant 0 : i32
    return %arg0, %c0_i32 : i32, i32
  }
  func.func @transform_1(%arg0: i32) -> (i32, i32) {
    %c0_i32 = arith.constant 0 : i32
    %c0_i32_0 = arith.constant 0 : i32
    %c0_i32_1 = arith.constant 0 : i32
    return %c0_i32, %c0_i32_0 : i32, i32
  }
  func.func @transform_2(%arg0: i32) -> (i32, i32) {
    %c0_i32 = arith.constant 0 : i32
    %c0_i32_0 = arith.constant 0 : i32
    %c0_i32_1 = arith.constant 0 : i32
    return %c0_i32, %c0_i32_0 : i32, i32
  }
  func.func @transform_3(%arg0: i32) -> (i32, i32) {
    %c0_i32 = arith.constant 0 : i32
    %c0_i32_0 = arith.constant 0 : i32
    return %arg0, %c0_i32 : i32, i32
  }
}

</mosaic_0001>

<llo_original>
// kernel: residual_attention.1
$region0: #{residual_attention.1}
  #allocation0 [shape = 'u32[]', space=smem, size = 0x4, offset = 0x4, fixed_abs, tag = 'smem constant byte address 0x4 - core index']
  #allocation1 [shape = 'u32[72,128]{1,0:T(1,128)}', space=vmem, size = 0x9000, scoped, tag = 'internal scratch']
  %s0 = inlined_call_operand.hbm [shape: f32[8,32], index: 0, kind: input, shape index: {}]
  %s1 = inlined_call_operand.hbm [shape: bf16[32,256], index: 1, kind: input, shape index: {}]
  %s2 = inlined_call_operand.hbm [shape: f32[1,256], index: 2, kind: input, shape index: {}]
  %s3 = inlined_call_operand.hbm [shape: f32[8,32], index: 3, kind: output, shape index: {}]
  %s4 = sld [smem:[#allocation0]]
  $region34: #{residual_attention.1} parent=0
    _
  %s6 = ssub.s32 1, %s4
  %s7 = scalar_select 0, %s6, %s4
  $region1: #{residual_attention.1} parent=0
    #allocation2 [shape = 'u8[4096]{0}', space=vmem, size = 0x1000, scoped, tag = 'input window, operand 0, single buffered']
    #allocation3 [shape = 's32[1]{0}', space=sflag, size = 0x4, scoped, tag = 'scoped memory for residual_attention.1']
    #allocation4 [shape = 's32[1]{0}', space=sflag, size = 0x4, scoped, tag = 'scoped memory for residual_attention.1']
    #allocation5 [shape = 'u8[16384]{0}', space=vmem, size = 0x4000, scoped, tag = 'input window, operand 1, single buffered']
    #allocation6 [shape = 's32[1]{0}', space=sflag, size = 0x4, scoped, tag = 'scoped memory for residual_attention.1']
    #allocation7 [shape = 'u8[1024]{0}', space=vmem, size = 0x400, scoped, tag = 'input window, operand 2, single buffered']
    #allocation8 [shape = 'u8[4096]{0}', space=vmem, size = 0x1000, scoped, tag = 'output window, operand 0, single buffered']
    %8 = vsyncpa [#allocation3], 0
    %9 = vsyncpa [#allocation6], 0
    %10 = vsyncpa [#allocation4], 0
    // Predicated region
    $region2: #{residual_attention.1} parent=1 // pred_check
      _
    $region3: #{residual_attention.1} parent=1 // pred_check_branch
      %12 = sbr.rel (0) target = $region5
    $region4: #{residual_attention.1} parent=1 // pred_region
      %14 = vsyncadd [#allocation3], 0
      %s16 = sshll.u32 %s0, 4
      %s17 = int_to_ptr.hbm [resolvable:$true] %s16
      %s18 = sshll.u32 [#allocation2], 4
      %s19 = int_to_ptr.vmem [resolvable:$true] %s18
      %21 = dma.hbm_to_vmem [thread:$0]  %s17, 128, %s19, [#allocation3]
    $region5: #{residual_attention.1} parent=1 // pred_fallthru
      _
    // Predicated region
    $region6: #{residual_attention.1} parent=1 // pred_check
      _
    $region7: #{residual_attention.1} parent=1 // pred_check_branch
      %23 = sbr.rel (0) target = $region9
    $region8: #{residual_attention.1} parent=1 // pred_region
      %25 = vsyncadd [#allocation6], 0
      %s26 = sshll.u32 %s1, 4
      %s27 = int_to_ptr.hbm [resolvable:$true] %s26
      %s28 = sshll.u32 [#allocation5], 4
      %s29 = int_to_ptr.vmem [resolvable:$true] %s28
      %34 = dma.hbm_to_vmem [thread:$0]  %s27, 512, %s29, [#allocation6], 128, 128, 8
    $region9: #{residual_attention.1} parent=1 // pred_fallthru
      _
    // Predicated region
    $region10: #{residual_attention.1} parent=1 // pred_check
      _
    $region11: #{residual_attention.1} parent=1 // pred_check_branch
      %36 = sbr.rel (0) target = $region13
    $region12: #{residual_attention.1} parent=1 // pred_region
      %38 = vsyncadd [#allocation6], 0
      %s40 = sshll.u32 %s2, 4
      %s41 = int_to_ptr.hbm [resolvable:$true] %s40
      %s42 = sshll.u32 [#allocation7], 4
      %s43 = int_to_ptr.vmem [resolvable:$true] %s42
      %45 = dma.hbm_to_vmem [thread:$0]  %s41, 32, %s43, [#allocation6]
    $region13: #{residual_attention.1} parent=1 // pred_fallthru
      _
    // Predicated region
    $region14: #{residual_attention.1} parent=1 // pred_check
      _
    $region15: #{residual_attention.1} parent=1 // pred_check_branch
      %47 = sbr.rel (0) target = $region17
    $region16: #{residual_attention.1} parent=1 // pred_region
      %49 = dma.done [#allocation3], 128
    $region17: #{residual_attention.1} parent=1 // pred_fallthru
      _
    // Predicated region
    $region18: #{residual_attention.1} parent=1 // pred_check
      _
    $region19: #{residual_attention.1} parent=1 // pred_check_branch
      %51 = sbr.rel (0) target = $region21
    $region20: #{residual_attention.1} parent=1 // pred_region
      %53 = dma.done [#allocation6], 512
    $region21: #{residual_attention.1} parent=1 // pred_fallthru
      _
    // Predicated region
    $region22: #{residual_attention.1} parent=1 // pred_check
      _
    $region23: #{residual_attention.1} parent=1 // pred_check_branch
      %55 = sbr.rel (0) target = $region25
    $region24: #{residual_attention.1} parent=1 // pred_region
      %57 = dma.done [#allocation6], 32
    $region25: #{residual_attention.1} parent=1 // pred_fallthru
      _
    %v59 = vld [vmem:[#allocation2] sm:$0xff]
    %v60 = vpack.c.bf16 %v59, %v59
    %v61 = vld [vmem:[#allocation5] sm:$0xff]
    %v62 = vld [vmem:[#allocation5 + $0x8] sm:$0xff]
    %v63 = vld [vmem:[#allocation5 + $0x10] sm:$0xff]
    %v64 = vld [vmem:[#allocation5 + $0x18] sm:$0xff]
    %v65 = vld [vmem:[#allocation7] sm:$0x3]
    %v67 = vperm.slane %v65, 0
    %v68 = vperm.slane %v65, 1
    %v75 = vunpack.c.l.b16 %v61
    %v76 = vunpack.c.h.b16 %v61
    %v77 = vunpack.c.l.b16 %v62
    %v78 = vunpack.c.h.b16 %v62
    %v79 = vunpack.c.l.b16 %v63
    %v80 = vunpack.c.h.b16 %v63
    %v81 = vunpack.c.l.b16 %v64
    %v82 = vunpack.c.h.b16 %v64
    %v83 = vpack.c.b16 %v77, %v75
    %v84 = vpack.c.b16 %v78, %v76
    %v85 = vpack.c.b16 %v81, %v79
    %v86 = vpack.c.b16 %v82, %v80
    %vm91 = vcmask 261120
    %v93 = vsel %vm91, %v60, 0
    %95 = vmatpush.bf16.msra.mxu0 0
    %96 = vmatpush.bf16.msra.mxu0 0
    %97 = vmatpush.bf16.msra.mxu0 0
    %98 = vmatpush.bf16.msra.mxu0 0
    %99 = vmatpush.bf16.msra.mxu0 0
    %100 = vmatpush.bf16.msra.mxu0 0
    %101 = vmatpush.bf16.msra.mxu0 %v85
    %102 = vmatpush.bf16.msra.mxu0 %v83
    %103 = vmatmul.bf16.gmra.mxu0 %v93
    %v104 = vpop.f32.mrf.mxu0
    %v105 = vadd.f32 %v67, %v104
    %v106 = vpop.f32.mrf.mxu0
    %107 = vdwg.mxu0
    %108 = vmatpush.bf16.msra.mxu0 0
    %109 = vmatpush.bf16.msra.mxu0 0
    %110 = vmatpush.bf16.msra.mxu0 0
    %111 = vmatpush.bf16.msra.mxu0 0
    %112 = vmatpush.bf16.msra.mxu0 0
    %113 = vmatpush.bf16.msra.mxu0 0
    %114 = vmatpush.bf16.msra.mxu0 %v86
    %115 = vmatpush.bf16.msra.mxu0 %v84
    %116 = vmatmul.bf16.gmra.mxu0 %v93
    %v117 = vpop.f32.mrf.mxu0
    %v118 = vadd.f32 %v68, %v117
    %v119 = vpop.f32.mrf.mxu0
    %120 = vdwg.mxu0
    %121 = vmax.xlane.f32.xlu0 %v105
    %v122 = vpop.xlane.xlu0 %121
    %v123 = vsub.f32 %v105, %v122
    %v124 = vmul.f32 %v123, 1.442695
    %v125 = vpow.pop %v124
    %126 = vadd.xlane.f32.xlu0 %v125
    %v127 = vpop.xlane.xlu0 %126
    %v128 = vrcp.pop %v127
    %v129 = vmul.f32 %v125, %v128
    %v130 = vmul.f32 %v129, %v59
    %v131 = vadd.f32 %v130, %v118
    %132 = vst.msk [vmem:[#allocation8] sm:$0xff] %vm91, %v131
    // Predicated region
    $region26: #{residual_attention.1} parent=1 // pred_check
      _
    $region27: #{residual_attention.1} parent=1 // pred_check_branch
      %134 = sbr.rel (0) target = $region29
    $region28: #{residual_attention.1} parent=1 // pred_region
      %136 = vsyncadd [#allocation4], 0
      %s138 = sshll.u32 [#allocation8], 4
      %s139 = int_to_ptr.vmem [resolvable:$true] %s138
      %s140 = sshll.u32 %s3, 4
      %s141 = int_to_ptr.hbm [resolvable:$true] %s140
      %143 = dma.vmem_to_hbm [thread:$0]  %s139, 128, %s141, [#allocation4]
    $region29: #{residual_attention.1} parent=1 // pred_fallthru
      _
    // Predicated region
    $region30: #{residual_attention.1} parent=1 // pred_check
      _
    $region31: #{residual_attention.1} parent=1 // pred_check_branch
      %145 = sbr.rel (0) target = $region33
    $region32: #{residual_attention.1} parent=1 // pred_region
      %147 = dma.done [#allocation4], 128
    $region33: #{residual_attention.1} parent=1 // pred_fallthru
      _
    %148 = vsyncpa [#allocation3], 1
    %149 = vsyncpa [#allocation6], 1
    %150 = vsyncpa [#allocation4], 1

</llo_original>
